<compile_context>
chip_gen: v7x
topology: tpu7x:2x2x1
jax: 0.10.0
libtpu: 0.0.40
codegen_flags: <defaults>
</compile_context>

<pallas_src>
import jax
import jax.numpy as jnp
from jax.experimental import pallas as pl
from jax.experimental.pallas import tpu as pltpu


def _mlp_kernel(x_ref, w1_ref, b1_ref, w2_ref, b2_ref, w3_ref, b3_ref, o_ref):
    # fc1 + ReLU  (MXU: bf16 operands, f32 accumulation; bias/ReLU in f32)
    x = x_ref[...].astype(jnp.bfloat16)          # no-op when the caller passes bf16
    h1 = jnp.dot(x, w1_ref[...], preferred_element_type=jnp.float32)
    h1 = jnp.maximum(h1 + b1_ref[...], 0.0)
    # fc2 + ReLU
    h2 = jnp.dot(h1.astype(jnp.bfloat16), w2_ref[...],
                 preferred_element_type=jnp.float32)
    h2 = jnp.maximum(h2 + b2_ref[...], 0.0)
    # fc3 + Sigmoid: an N=1 matmul wastes an MXU pass -> VPU mul + lane reduce.
    logits = jnp.sum(h2 * w3_ref[...], axis=-1, keepdims=True) + b3_ref[...]
    o_ref[...] = jax.nn.sigmoid(logits).astype(o_ref.dtype)


_TB_MAX = 8192  # batch-tile ceiling (rows); actual TB is VMEM-budgeted below.


def _round_up(n, m):
    return ((n + m - 1) // m) * m


def _vmem_budget_bytes():
    # Half the physical per-core VMEM: 64 MiB on v5e/v6e, 32 MiB on v7x.
    try:
        cap = pltpu.get_tpu_info().vmem_capacity_bytes
    except Exception:
        cap = 64 << 20  # conservative fallback (v7x per-TC size)
    return cap // 2


def _pick_tile(batch, d, x_itemsize):
    """VMEM-budgeted batch tile + the vmem_limit to request."""
    per_row = (2 * d * x_itemsize      # double-buffered x tile
               + d * 2                 # in-kernel bf16 copy of x
               + 128 * 4 + 64 * 4      # f32 h1 / h2 intermediates
               + 2 * 4)                # double-buffered (TB,1) output column
    # Resident weights/biases (count 2x: BlockSpec allocates two buffers even
    # for constant index_maps).
    fixed = 2 * (d * 128 * 2 + 128 * 64 * 2 + (128 + 64 + 64 + 1) * 4)
    budget = _vmem_budget_bytes()
    # TODO(synk): for very large D (fixed+per_row blowing the budget) split the
    # feature dim with a trailing "arbitrary" K grid axis + f32 h1 accumulator
    # instead of shrinking TB this aggressively.
    tb_fit = max(8, ((budget - fixed) // per_row) // 8 * 8)
    tb = min(_TB_MAX, _round_up(batch, 8), tb_fit)
    # Guarantee >=2 grid steps when the batch allows it so the "parallel" axis
    # actually shards across both TensorCores on v7x (one extra ~0.35us step on
    # single-TC chips -> negligible).
    tb_half = max(8, _round_up(pl.cdiv(_round_up(batch, 8), 2), 8))
    tb = max(8, min(tb, tb_half))
    return tb, int(budget)


@jax.jit
def feedforward(x, w1, b1, w2, b2, w3, b3):
    """x: (B, input_dim) f32 or bf16 -> (B, 1) f32 sigmoid output."""
    B, D = x.shape
    TB, vmem_limit = _pick_tile(B, D, x.dtype.itemsize)
    num_tiles = pl.cdiv(B, TB)

    # MXU operands in bf16 (accumulation stays f32 inside the kernel).
    w1_bf = w1.astype(jnp.bfloat16)
    w2_bf = w2.astype(jnp.bfloat16)
    # Biases as (1, N) f32 rows so they broadcast over the batch (sublane) axis.
    b1_2d = b1.reshape(1, -1).astype(jnp.float32)
    b2_2d = b2.reshape(1, -1).astype(jnp.float32)
    w3_row = w3.reshape(1, -1).astype(jnp.float32)   # (1, 64): fc3 weights
    b3_2d = b3.reshape(1, 1).astype(jnp.float32)

    def resident(arr):
        # Full-array block with a constant index_map: same block every grid
        # step -> DMAed once, stays VMEM-resident.
        return pl.BlockSpec(arr.shape, lambda i: (0, 0))

    flops = 2 * B * (D * 128 + 128 * 64 + 64)
    bytes_accessed = (
        x.size * x.dtype.itemsize                      # x stream (dominant)
        + w1_bf.size * 2 + w2_bf.size * 2              # bf16 weights
        + (b1_2d.size + b2_2d.size + w3_row.size + b3_2d.size) * 4
        + B * 4)                                       # output

    return pl.pallas_call(
        _mlp_kernel,
        out_shape=jax.ShapeDtypeStruct((B, 1), jnp.float32),
        grid=(num_tiles,),
        in_specs=[
            pl.BlockSpec((TB, D), lambda i: (i, 0)),   # x tile, pipelined
            resident(w1_bf), resident(b1_2d),
            resident(w2_bf), resident(b2_2d),
            resident(w3_row), resident(b3_2d),
        ],
        out_specs=pl.BlockSpec((TB, 1), lambda i: (i, 0)),
        compiler_params=pltpu.CompilerParams(
            dimension_semantics=("parallel",),         # 2 TCs on v7x
            vmem_limit_bytes=vmem_limit),
        cost_estimate=pl.CostEstimate(
            flops=flops, transcendentals=B, bytes_accessed=bytes_accessed),
    )(x, w1_bf, b1_2d, w2_bf, b2_2d, w3_row, b3_2d)


def init_params(key, input_dim):
    """PyTorch-style Linear init: U(-1/sqrt(fan_in), 1/sqrt(fan_in)).

    Weights are stored (in_features, out_features), i.e. pre-transposed
    relative to nn.Linear's (out, in) storage.
    """
    def linear(k, fan_in, fan_out):
        kw, kb = jax.random.split(k)
        bound = 1.0 / jnp.sqrt(fan_in)
        w = jax.random.uniform(kw, (fan_in, fan_out), jnp.float32, -bound, bound)
        b = jax.random.uniform(kb, (fan_out,), jnp.float32, -bound, bound)
        return w, b

    k1, k2, k3 = jax.random.split(key, 3)
    w1, b1 = linear(k1, input_dim, 128)
    w2, b2 = linear(k2, 128, 64)
    w3, b3 = linear(k3, 64, 1)
    return w1, b1, w2, b2, w3, b3


def _reference(x, params, matmul_dtype=jnp.float32):
    """Plain-JAX forward matching the PyTorch module (optionally bf16 matmuls)."""
    w1, b1, w2, b2, w3, b3 = params
    h = jnp.maximum(
        jnp.dot(x.astype(matmul_dtype), w1.astype(matmul_dtype),
                preferred_element_type=jnp.float32) + b1, 0.0)
    h = jnp.maximum(
        jnp.dot(h.astype(matmul_dtype), w2.astype(matmul_dtype),
                preferred_element_type=jnp.float32) + b2, 0.0)
    logits = jnp.sum(h * w3.reshape(1, -1), axis=-1, keepdims=True) + b3
    return jax.nn.sigmoid(logits)


if __name__ == "__main__":
    key = jax.random.PRNGKey(0)
    k_x1, k_x2, k_p = jax.random.split(key, 3)

    input_dim = 32
    params = init_params(k_p, input_dim)

    # Tiny batch: B < 8 exercises the single ragged (clipped) block path.
    x_small = jax.random.normal(k_x1, (2, input_dim), jnp.float32)
    out_small = jax.block_until_ready(feedforward(x_small, *params))
    assert out_small.shape == (2, 1)

    # Non-tile-multiple batch: multi-step grid + ragged last tile, no pad copy.
    x_big = jax.random.normal(k_x2, (2001, input_dim), jnp.float32)
    out_big = jax.block_until_ready(feedforward(x_big, *params))
    assert out_big.shape == (2001, 1)

    for x, out in ((x_small, out_small), (x_big, out_big)):
        # Tight check vs. a reference doing the same bf16-operand math.
        ref_bf16 = _reference(x, params, matmul_dtype=jnp.bfloat16)
        assert jnp.allclose(out, ref_bf16, atol=2e-4, rtol=2e-4), float(
            jnp.max(jnp.abs(out - ref_bf16)))
        # Loose check vs. the full-f32 PyTorch-equivalent forward.
        ref_f32 = _reference(x, params, matmul_dtype=jnp.float32)
        assert jnp.allclose(out, ref_f32, atol=3e-2), float(
            jnp.max(jnp.abs(out - ref_f32)))

    # bf16 activations from the caller (halves the dominant HBM stream).
    x_bf = x_big.astype(jnp.bfloat16)
    out_bf = jax.block_until_ready(feedforward(x_bf, *params))
    ref_bf = _reference(x_bf.astype(jnp.float32), params, matmul_dtype=jnp.bfloat16)
    assert out_bf.shape == (2001, 1)
    assert jnp.allclose(out_bf, ref_bf, atol=5e-4), float(
        jnp.max(jnp.abs(out_bf - ref_bf)))

    print("KERNEL_OK")
</pallas_src>

<mosaic_0001>
module attributes {stable_mosaic.version = 11 : i64} {
  func.func @_mlp_kernel(%arg0: i32, %arg1: memref<8x32xf32, #tpu.memory_space<vmem>>, %arg2: memref<32x128xbf16, #tpu.memory_space<vmem>>, %arg3: memref<1x128xf32, #tpu.memory_space<vmem>>, %arg4: memref<128x64xbf16, #tpu.memory_space<vmem>>, %arg5: memref<1x64xf32, #tpu.memory_space<vmem>>, %arg6: memref<1x64xf32, #tpu.memory_space<vmem>>, %arg7: memref<1x1xf32, #tpu.memory_space<vmem>>, %arg8: memref<8x1xf32, #tpu.memory_space<vmem>>) attributes {dimension_semantics = [#tpu.dimension_semantics<parallel>], iteration_bounds = array<i64: 1>, scalar_prefetch = 0 : i64, scratch_operands = 0 : i64, tpu.core_type = #tpu.core_type<tc>, window_params = [{transform_indices = @transform_0, window_bounds = array<i64: 8, 32>}, {pipeline_mode = #tpu.pipeline_mode<synchronous>, transform_indices = @transform_1, window_bounds = array<i64: 32, 128>}, {pipeline_mode = #tpu.pipeline_mode<synchronous>, transform_indices = @transform_2, window_bounds = array<i64: 1, 128>}, {pipeline_mode = #tpu.pipeline_mode<synchronous>, transform_indices = @transform_3, window_bounds = array<i64: 128, 64>}, {pipeline_mode = #tpu.pipeline_mode<synchronous>, transform_indices = @transform_4, window_bounds = array<i64: 1, 64>}, {pipeline_mode = #tpu.pipeline_mode<synchronous>, transform_indices = @transform_5, window_bounds = array<i64: 1, 64>}, {pipeline_mode = #tpu.pipeline_mode<synchronous>, transform_indices = @transform_6, window_bounds = array<i64: 1, 1>}, {transform_indices = @transform_7, window_bounds = array<i64: 8, 1>}]} {
    %c0 = arith.constant 0 : index
    %c0_0 = arith.constant 0 : index
    %0 = vector.load %arg1[%c0, %c0_0] : memref<8x32xf32, #tpu.memory_space<vmem>>, vector<8x32xf32>
    %1 = arith.truncf %0 : vector<8x32xf32> to vector<8x32xbf16>
    %c0_1 = arith.constant 0 : index
    %c0_2 = arith.constant 0 : index
    %2 = vector.load %arg2[%c0_1, %c0_2] : memref<32x128xbf16, #tpu.memory_space<vmem>>, vector<32x128xbf16>
    %cst = arith.constant dense<0.000000e+00> : vector<8x128xf32>
    %3 = tpu.matmul %1, %2, %cst {dimension_numbers = #tpu.dot_dimension_numbers<[1], [0], [0], [1], [0, 0, 1, 1], [], []>} : vector<8x32xbf16>, vector<32x128xbf16>, vector<8x128xf32> -> vector<8x128xf32>
    %c0_3 = arith.constant 0 : index
    %c0_4 = arith.constant 0 : index
    %4 = vector.load %arg3[%c0_3, %c0_4] : memref<1x128xf32, #tpu.memory_space<vmem>>, vector<1x128xf32>
    %5 = vector.broadcast %4 : vector<1x128xf32> to vector<8x128xf32>
    %6 = arith.addf %3, %5 : vector<8x128xf32>
    %cst_5 = arith.constant 0.000000e+00 : f32
    %7 = vector.broadcast %cst_5 : f32 to vector<8x128xf32>
    %8 = arith.maximumf %6, %7 : vector<8x128xf32>
    %9 = arith.truncf %8 : vector<8x128xf32> to vector<8x128xbf16>
    %c0_6 = arith.constant 0 : index
    %c0_7 = arith.constant 0 : index
    %10 = vector.load %arg4[%c0_6, %c0_7] : memref<128x64xbf16, #tpu.memory_space<vmem>>, vector<128x64xbf16>
    %cst_8 = arith.constant dense<0.000000e+00> : vector<8x64xf32>
    %11 = tpu.matmul %9, %10, %cst_8 {dimension_numbers = #tpu.dot_dimension_numbers<[1], [0], [0], [1], [0, 0, 1, 1], [], []>} : vector<8x128xbf16>, vector<128x64xbf16>, vector<8x64xf32> -> vector<8x64xf32>
    %c0_9 = arith.constant 0 : index
    %c0_10 = arith.constant 0 : index
    %12 = vector.load %arg5[%c0_9, %c0_10] : memref<1x64xf32, #tpu.memory_space<vmem>>, vector<1x64xf32>
    %13 = vector.broadcast %12 : vector<1x64xf32> to vector<8x64xf32>
    %14 = arith.addf %11, %13 : vector<8x64xf32>
    %cst_11 = arith.constant 0.000000e+00 : f32
    %15 = vector.broadcast %cst_11 : f32 to vector<8x64xf32>
    %16 = arith.maximumf %14, %15 : vector<8x64xf32>
    %c0_12 = arith.constant 0 : index
    %c0_13 = arith.constant 0 : index
    %17 = vector.load %arg6[%c0_12, %c0_13] : memref<1x64xf32, #tpu.memory_space<vmem>>, vector<1x64xf32>
    %18 = vector.broadcast %17 : vector<1x64xf32> to vector<8x64xf32>
    %19 = arith.mulf %16, %18 : vector<8x64xf32>
    %cst_14 = arith.constant dense<0.000000e+00> : vector<8xf32>
    %20 = vector.multi_reduction <add>, %19, %cst_14 [1] : vector<8x64xf32> to vector<8xf32>
    %21 = vector.shape_cast %20 : vector<8xf32> to vector<8x1xf32>
    %c0_15 = arith.constant 0 : index
    %c0_16 = arith.constant 0 : index
    %22 = vector.load %arg7[%c0_15, %c0_16] : memref<1x1xf32, #tpu.memory_space<vmem>>, vector<1x1xf32>
    %23 = vector.broadcast %22 : vector<1x1xf32> to vector<8x1xf32>
    %24 = arith.addf %21, %23 : vector<8x1xf32>
    %25 = arith.negf %24 : vector<8x1xf32>
    %26 = math.exp %25 : vector<8x1xf32>
    %cst_17 = arith.constant 1.000000e+00 : f32
    %27 = vector.broadcast %cst_17 : f32 to vector<8x1xf32>
    %28 = arith.addf %27, %26 : vector<8x1xf32>
    %29 = arith.divf %27, %28 : vector<8x1xf32>
    %c0_18 = arith.constant 0 : index
    %c0_19 = arith.constant 0 : index
    %30 = vector.load %arg8[%c0_18, %c0_19] : memref<8x1xf32, #tpu.memory_space<vmem>>, vector<8x1xf32>
    tpu.vector_store %arg8[%c0_18, %c0_19], %29 {strides = array<i32>} : memref<8x1xf32, #tpu.memory_space<vmem>>, vector<8x1xf32>,
    return
  }
  func.func @transform_0(%arg0: i32) -> (i32, i32) {
    %c0_i32 = arith.constant 0 : i32
    %c0_i32_0 = arith.constant 0 : i32
    return %arg0, %c0_i32 : i32, i32
  }
  func.func @transform_1(%arg0: i32) -> (i32, i32) {
    %c0_i32 = arith.constant 0 : i32
    %c0_i32_0 = arith.constant 0 : i32
    %c0_i32_1 = arith.constant 0 : i32
    return %c0_i32, %c0_i32_0 : i32, i32
  }
  func.func @transform_2(%arg0: i32) -> (i32, i32) {
    %c0_i32 = arith.constant 0 : i32
    %c0_i32_0 = arith.constant 0 : i32
    %c0_i32_1 = arith.constant 0 : i32
    return %c0_i32, %c0_i32_0 : i32, i32
  }
  func.func @transform_3(%arg0: i32) -> (i32, i32) {
    %c0_i32 = arith.constant 0 : i32
    %c0_i32_0 = arith.constant 0 : i32
    %c0_i32_1 = arith.constant 0 : i32
    return %c0_i32, %c0_i32_0 : i32, i32
  }
  func.func @transform_4(%arg0: i32) -> (i32, i32) {
    %c0_i32 = arith.constant 0 : i32
    %c0_i32_0 = arith.constant 0 : i32
    %c0_i32_1 = arith.constant 0 : i32
    return %c0_i32, %c0_i32_0 : i32, i32
  }
  func.func @transform_5(%arg0: i32) -> (i32, i32) {
    %c0_i32 = arith.constant 0 : i32
    %c0_i32_0 = arith.constant 0 : i32
    %c0_i32_1 = arith.constant 0 : i32
    return %c0_i32, %c0_i32_0 : i32, i32
  }
  func.func @transform_6(%arg0: i32) -> (i32, i32) {
    %c0_i32 = arith.constant 0 : i32
    %c0_i32_0 = arith.constant 0 : i32
    %c0_i32_1 = arith.constant 0 : i32
    return %c0_i32, %c0_i32_0 : i32, i32
  }
  func.func @transform_7(%arg0: i32) -> (i32, i32) {
    %c0_i32 = arith.constant 0 : i32
    %c0_i32_0 = arith.constant 0 : i32
    return %arg0, %c0_i32 : i32, i32
  }
}

</mosaic_0001>

<llo_original>
// kernel: feedforward.1
$region0: #{feedforward.1}
  #allocation0 [shape = 'u32[]', space=smem, size = 0x4, offset = 0x4, fixed_abs, tag = 'smem constant byte address 0x4 - core index']
  #allocation1 [shape = 'u32[144,128]{1,0:T(1,128)}', space=vmem, size = 0x12000, scoped, tag = 'internal scratch']
  #allocation2 [shape = 'f32[1,1]{1,0:T(1,128)S(1)}', space=vmem, size = 0x200, scoped, tag = 'scoped memory for feedforward.1']
  %s0 = inlined_call_operand.vmem [shape: f32[2,32], index: 0, kind: input, shape index: {}]
  %s1 = inlined_call_operand.vmem [shape: bf16[32,128], index: 1, kind: input, shape index: {}]
  %s2 = inlined_call_operand.vmem [shape: f32[1,128], index: 2, kind: input, shape index: {}]
  %s3 = inlined_call_operand.vmem [shape: bf16[128,64], index: 3, kind: input, shape index: {}]
  %s4 = inlined_call_operand.vmem [shape: f32[1,64], index: 4, kind: input, shape index: {}]
  %s5 = inlined_call_operand.vmem [shape: f32[1,64], index: 5, kind: input, shape index: {}]
  %s6 = inlined_call_operand.<no memory space> [shape: f32[1,1], index: 6, kind: input, shape index: {}]
  %s7 = inlined_call_operand.vmem [shape: f32[2,1], index: 7, kind: output, shape index: {}]
  %s8 = sld [smem:[#allocation0]]
  $region68: #{feedforward.1} parent=0
    _
  %s10 = ssub.s32 1, %s8
  %s11 = scalar_select 0, %s10, %s8
  %v12 = vstv %s6
  %13 = vst [vmem:[#allocation2] sm:$0x1] %v12
  $region1: #{feedforward.1} parent=0
    #allocation3 [shape = 'u8[4096]{0}', space=vmem, size = 0x1000, scoped, tag = 'output window, operand 0, single buffered']
    // Predicated region
    $region2: #{feedforward.1} parent=1 // pred_check
      _
    $region3: #{feedforward.1} parent=1 // pred_check_branch
      %15 = sbr.rel (0) target = $region5
    $region4: #{feedforward.1} parent=1 // pred_region
      _
    $region5: #{feedforward.1} parent=1 // pred_fallthru
      _
    // Predicated region
    $region6: #{feedforward.1} parent=1 // pred_check
      _
    $region7: #{feedforward.1} parent=1 // pred_check_branch
      %17 = sbr.rel (0) target = $region9
    $region8: #{feedforward.1} parent=1 // pred_region
      _
    $region9: #{feedforward.1} parent=1 // pred_fallthru
      _
    // Predicated region
    $region10: #{feedforward.1} parent=1 // pred_check
      _
    $region11: #{feedforward.1} parent=1 // pred_check_branch
      %19 = sbr.rel (0) target = $region13
    $region12: #{feedforward.1} parent=1 // pred_region
      _
    $region13: #{feedforward.1} parent=1 // pred_fallthru
      _
    // Predicated region
    $region14: #{feedforward.1} parent=1 // pred_check
      _
    $region15: #{feedforward.1} parent=1 // pred_check_branch
      %21 = sbr.rel (0) target = $region17
    $region16: #{feedforward.1} parent=1 // pred_region
      _
    $region17: #{feedforward.1} parent=1 // pred_fallthru
      _
    // Predicated region
    $region18: #{feedforward.1} parent=1 // pred_check
      _
    $region19: #{feedforward.1} parent=1 // pred_check_branch
      %23 = sbr.rel (0) target = $region21
    $region20: #{feedforward.1} parent=1 // pred_region
      _
    $region21: #{feedforward.1} parent=1 // pred_fallthru
      _
    // Predicated region
    $region22: #{feedforward.1} parent=1 // pred_check
      _
    $region23: #{feedforward.1} parent=1 // pred_check_branch
      %25 = sbr.rel (0) target = $region25
    $region24: #{feedforward.1} parent=1 // pred_region
      _
    $region25: #{feedforward.1} parent=1 // pred_fallthru
      _
    // Predicated region
    $region26: #{feedforward.1} parent=1 // pred_check
      _
    $region27: #{feedforward.1} parent=1 // pred_check_branch
      %27 = sbr.rel (0) target = $region29
    $region28: #{feedforward.1} parent=1 // pred_region
      _
    $region29: #{feedforward.1} parent=1 // pred_fallthru
      _
    %v29 = vld [vmem:[%s0] sm:$0xff]
    %v30 = vpack.c.bf16 %v29, %v29
    %v31 = vld [vmem:[%s1] sm:$0xf]
    %v32 = vld [vmem:[%s1 + $0x4] sm:$0xf]
    %v33 = vld [vmem:[%s1 + $0x8] sm:$0xf]
    %v34 = vld [vmem:[%s1 + $0xc] sm:$0xf]
    %v35 = vld [vmem:[%s2] sm:$0x1]
    %v37 = vlaneseq
    %v38 = vshrl.u32 %v37, 7
    %v39 = vsub.s32 0, %v38
    %v40 = vrot.slane %v35, %v39
    %v46 = vunpack.c.l.b16 %v31
    %v47 = vunpack.c.l.b16 %v32
    %v48 = vunpack.c.l.b16 %v33
    %v49 = vunpack.c.l.b16 %v34
    %v50 = vpack.c.b16 %v47, %v46
    %v51 = vpack.c.b16 %v49, %v48
    %vm54 = vcmask 261120
    %v56 = vsel %vm54, %v30, 0
    %58 = vmatprep.subr.bf16.mxu0 0
    %59 = vmatpush1.bf16.msra.mxu0 %v50
    %60 = vmatprep.subr.bf16.mxu0 0
    %61 = vmatpush1.bf16.msra.mxu0 %v51
    %62 = vmatprep.subr.bf16.mxu0 0
    %63 = vmatpush1.bf16.msra.mxu0 0
    %64 = vmatprep.subr.bf16.mxu0 0
    %65 = vmatpush1.bf16.msra.mxu0 0
    %66 = vmatprep.subr.bf16.mxu0 0
    %67 = vmatpush1.bf16.msra.mxu0 0
    %68 = vmatprep.subr.bf16.mxu0 0
    %69 = vmatpush1.bf16.msra.mxu0 0
    %70 = vmatprep.subr.bf16.mxu0 0
    %71 = vmatpush1.bf16.msra.mxu0 0
    %72 = vmatprep.subr.bf16.mxu0 0
    %73 = vmatpush1.bf16.msra.mxu0 0
    %74 = vmatprep.subr.bf16.mxu0 0
    %75 = vmatpush1.bf16.msra.mxu0 0
    %76 = vmatprep.subr.bf16.mxu0 0
    %77 = vmatpush1.bf16.msra.mxu0 0
    %78 = vmatprep.subr.bf16.mxu0 0
    %79 = vmatpush1.bf16.msra.mxu0 0
    %80 = vmatprep.subr.bf16.mxu0 0
    %81 = vmatpush1.bf16.msra.mxu0 0
    %82 = vmatprep.subr.bf16.mxu0 0
    %83 = vmatpush1.bf16.msra.mxu0 0
    %84 = vmatprep.subr.bf16.mxu0 0
    %85 = vmatpush1.bf16.msra.mxu0 0
    %86 = vmatprep.subr.bf16.mxu0 0
    %87 = vmatpush1.bf16.msra.mxu0 0
    %88 = vmatprep.subr.bf16.mxu0 0
    %89 = vmatpush1.bf16.msra.mxu0 0
    %90 = vmatprep.mubr.bf16.mxu0 0
    %91 = vmatmul.mubr.bf16.gmra.mrb[0].mxu0 %v56
    %v92 = vpop.f32.mrb[0].mxu0
    %v93 = vadd.f32 %v40, %v92
    %v94 = vpop.f32.mrb[0].mxu0
    %v95 = vpop.f32.mrb[0].mxu0
    %v96 = vpop.f32.mrb[0].mxu0
    %97 = vdwg.mxu0
    %v98 = vmax.f32 %v93, 0.0
    %v99 = vpack.c.bf16 %v98, %v98
    %v100 = vld [vmem:[%s3] sm:$0xf]
    %v101 = vld [vmem:[%s3 + $0x4] sm:$0xf]
    %v102 = vld [vmem:[%s3 + $0x8] sm:$0xf]
    %v103 = vld [vmem:[%s3 + $0xc] sm:$0xf]
    %v104 = vld [vmem:[%s3 + $0x10] sm:$0xf]
    %v105 = vld [vmem:[%s3 + $0x14] sm:$0xf]
    %v106 = vld [vmem:[%s3 + $0x18] sm:$0xf]
    %v107 = vld [vmem:[%s3 + $0x1c] sm:$0xf]
    %v108 = vld [vmem:[%s3 + $0x20] sm:$0xf]
    %v109 = vld [vmem:[%s3 + $0x24] sm:$0xf]
    %v110 = vld [vmem:[%s3 + $0x28] sm:$0xf]
    %v111 = vld [vmem:[%s3 + $0x2c] sm:$0xf]
    %v112 = vld [vmem:[%s3 + $0x30] sm:$0xf]
    %v113 = vld [vmem:[%s3 + $0x34] sm:$0xf]
    %v114 = vld [vmem:[%s3 + $0x38] sm:$0xf]
    %v115 = vld [vmem:[%s3 + $0x3c] sm:$0xf]
    %v116 = vld [vmem:[%s4] sm:$0x1]
    %v118 = vlaneseq
    %v119 = vshrl.u32 %v118, 7
    %v120 = vsub.s32 0, %v119
    %v121 = vrot.slane %v116, %v120
    %v139 = vunpack.c.l.b16 %v100
    %v140 = vunpack.c.l.b16 %v101
    %v141 = vunpack.c.l.b16 %v102
    %v142 = vunpack.c.l.b16 %v103
    %v143 = vunpack.c.l.b16 %v104
    %v144 = vunpack.c.l.b16 %v105
    %v145 = vunpack.c.l.b16 %v106
    %v146 = vunpack.c.l.b16 %v107
    %v147 = vunpack.c.l.b16 %v108
    %v148 = vunpack.c.l.b16 %v109
    %v149 = vunpack.c.l.b16 %v110
    %v150 = vunpack.c.l.b16 %v111
    %v151 = vunpack.c.l.b16 %v112
    %v152 = vunpack.c.l.b16 %v113
    %v153 = vunpack.c.l.b16 %v114
    %v154 = vunpack.c.l.b16 %v115
    %v155 = vpack.c.b16 %v140, %v139
    %v156 = vpack.c.b16 %v142, %v141
    %v157 = vpack.c.b16 %v144, %v143
    %v158 = vpack.c.b16 %v146, %v145
    %v159 = vpack.c.b16 %v148, %v147
    %v160 = vpack.c.b16 %v150, %v149
    %v161 = vpack.c.b16 %v152, %v151
    %v162 = vpack.c.b16 %v154, %v153
    %171 = vmatprep.subr.bf16.mxu0 0
    %172 = vmatpush1.bf16.msra.mxu0 %v155
    %173 = vmatprep.subr.bf16.mxu0 0
    %174 = vmatpush1.bf16.msra.mxu0 %v156
    %175 = vmatprep.subr.bf16.mxu0 0
    %176 = vmatpush1.bf16.msra.mxu0 %v157
    %177 = vmatprep.subr.bf16.mxu0 0
    %178 = vmatpush1.bf16.msra.mxu0 %v158
    %179 = vmatprep.subr.bf16.mxu0 0
    %180 = vmatpush1.bf16.msra.mxu0 %v159
    %181 = vmatprep.subr.bf16.mxu0 0
    %182 = vmatpush1.bf16.msra.mxu0 %v160
    %183 = vmatprep.subr.bf16.mxu0 0
    %184 = vmatpush1.bf16.msra.mxu0 %v161
    %185 = vmatprep.subr.bf16.mxu0 0
    %186 = vmatpush1.bf16.msra.mxu0 %v162
    %187 = vmatprep.subr.bf16.mxu0 0
    %188 = vmatpush1.bf16.msra.mxu0 0
    %189 = vmatprep.subr.bf16.mxu0 0
    %190 = vmatpush1.bf16.msra.mxu0 0
    %191 = vmatprep.subr.bf16.mxu0 0
    %192 = vmatpush1.bf16.msra.mxu0 0
    %193 = vmatprep.subr.bf16.mxu0 0
    %194 = vmatpush1.bf16.msra.mxu0 0
    %195 = vmatprep.subr.bf16.mxu0 0
    %196 = vmatpush1.bf16.msra.mxu0 0
    %197 = vmatprep.subr.bf16.mxu0 0
    %198 = vmatpush1.bf16.msra.mxu0 0
    %199 = vmatprep.subr.bf16.mxu0 0
    %200 = vmatpush1.bf16.msra.mxu0 0
    %201 = vmatprep.subr.bf16.mxu0 0
    %202 = vmatpush1.bf16.msra.mxu0 0
    %203 = vmatprep.mubr.bf16.mxu0 0
    %204 = vmatmul.mubr.bf16.gmra.mrb[0].mxu0 %v99
    %v205 = vpop.f32.mrb[0].mxu0
    %v206 = vadd.f32 %v121, %v205
    %v207 = vpop.f32.mrb[0].mxu0
    %v208 = vpop.f32.mrb[0].mxu0
    %v209 = vpop.f32.mrb[0].mxu0
    %210 = vdwg.mxu0
    %v211 = vmax.f32 %v206, 0.0
    %v212 = vld [vmem:[%s5] sm:$0x1]
    %v214 = vlaneseq
    %v215 = vshrl.u32 %v214, 7
    %v216 = vsub.s32 0, %v215
    %v217 = vrot.slane %v212, %v216
    %v219 = vmul.f32 %v211, %v217
    %vm220 = vcmask 523264
    %v221 = vsel %vm220, %v219, 0.0
    %222 = vadd.xlane.f32.xlu0 %v221
    %v223 = vpop.xlane.xlu0 %222
    %v224 = vld [vmem:[#allocation2] sm:$0x1]
    %v226 = vlaneseq
    %v227 = vshrl.u32 %v226, 7
    %v228 = vsub.s32 0, %v227
    %v229 = vrot.slane %v224, %v228
    %v231 = vadd.f32 %v223, %v229
    %v232 = vxor.u32 %v231, 2147483648
    %v233 = vmul.f32 %v232, 1.442695
    %v234 = vpow.pop %v233
    %v235 = vadd.f32 %v234, 1.0
    %v236 = vrcp.pop %v235
    %v237 = vmul.f32 1.0, %v236
    %vm238 = vcmask 7168
    %239 = vst.msk [vmem:[#allocation3] sm:$0xff] %vm238, %v237
    // Predicated region
    $region30: #{feedforward.1} parent=1 // pred_check
      _
    $region31: #{feedforward.1} parent=1 // pred_check_branch
      %241 = sbr.rel (0) target = $region33
    $region32: #{feedforward.1} parent=1 // pred_region
      // Predicated region
      $region34: #{feedforward.1} parent=32 // pred_check
        _
      $region35: #{feedforward.1} parent=32 // pred_check_branch
        %243 = sbr.rel (0) target = $region37
      $region36: #{feedforward.1} parent=32 // pred_region
        // Predicated region
        $region38: #{feedforward.1} parent=36 // pred_check
          _
        $region39: #{feedforward.1} parent=36 // pred_check_branch
          %245 = sbr.rel target = $region41
        $region40: #{feedforward.1} parent=36 // pred_region
          // Predicated region
          $region53: #{feedforward.1} parent=40 // pred_check
            _
          $region54: #{feedforward.1} parent=40 // pred_check_branch
            %260 = sbr.rel (0) target = $region56
          $region55: #{feedforward.1} parent=40 // pred_region
            loop: start=0, step=1, limit=1
            $region57: #{feedforward.1} parent=55 // loop_pre_header
              _
            $region58: #{feedforward.1} parent=55 // loop_header
              %s263 = sphi 0, %s267
              %p264 = scmp.ge.s32.totalorder %s263, 1
              %s268 = sphi [#allocation3], [#allocation3]
              %s269 = sphi %s7, %s7
            $region59: #{feedforward.1} parent=55 // loop_header_branch
              %266 = sbr.rel (%p264) target = $region63
            $region60: #{feedforward.1} parent=55 // loop_body
              %v270 = vld [vmem:[%s268] sm:$0x3]
              %271 = vst [vmem:[%s269] sm:$0x3] %v270
            $region61: #{feedforward.1} parent=55 // loop_footer
              %s267 = sadd.s32 1, %s263
            $region62: #{feedforward.1} parent=55 // loop_footer_branch
              %262 = sbr.rel target = $region58
            $region63: #{feedforward.1} parent=55 // loop_exit
              _
          $region56: #{feedforward.1} parent=40 // pred_fallthru
            _
        $region41: #{feedforward.1} parent=36 // pred_fallthru
          _
        // Predicated region
        $region42: #{feedforward.1} parent=36 // pred_check
          _
        $region43: #{feedforward.1} parent=36 // pred_check_branch
          %247 = sbr.rel (0) target = $region45
        $region44: #{feedforward.1} parent=36 // pred_region
          loop: start=0, step=1, limit=1
          $region46: #{feedforward.1} parent=44 // loop_pre_header
            _
          $region47: #{feedforward.1} parent=44 // loop_header
            %s250 = sphi 0, %s254
            %p251 = scmp.ge.s32.totalorder %s250, 1
            %s255 = sphi [#allocation3], [#allocation3]
            %s256 = sphi %s7, %s7
          $region48: #{feedforward.1} parent=44 // loop_header_branch
            %253 = sbr.rel (%p251) target = $region52
          $region49: #{feedforward.1} parent=44 // loop_body
            %v257 = vld [vmem:[%s255] sm:$0x3]
            %258 = vst [vmem:[%s256] sm:$0x3] %v257
          $region50: #{feedforward.1} parent=44 // loop_footer
            %s254 = sadd.s32 1, %s250
          $region51: #{feedforward.1} parent=44 // loop_footer_branch
            %249 = sbr.rel target = $region47
          $region52: #{feedforward.1} parent=44 // loop_exit
            _
        $region45: #{feedforward.1} parent=36 // pred_fallthru
          _
      $region37: #{feedforward.1} parent=32 // pred_fallthru
        _
      %272 = vnop
    $region33: #{feedforward.1} parent=1 // pred_fallthru
      _
    // Predicated region
    $region64: #{feedforward.1} parent=1 // pred_check
      _
    $region65: #{feedforward.1} parent=1 // pred_check_branch
      %274 = sbr.rel (0) target = $region67
    $region66: #{feedforward.1} parent=1 // pred_region
      _
    $region67: #{feedforward.1} parent=1 // pred_fallthru
      _

</llo_original>
